<compile_context>
chip_gen: v5e
topology: v5e:2x2
jax: 0.10.0
libtpu: 0.0.40
codegen_flags: <defaults>
</compile_context>

<pallas_src>
import functools

import jax
import jax.numpy as jnp
from jax import lax
from jax.experimental import pallas as pl
from jax.experimental.pallas import tpu as pltpu

# ----------------------------- configuration --------------------------------
BATCH = 2
MAX_SEQ_LEN = 8          # T
HIDDEN_DIM = 32          # H (output width of the bidirectional LSTM)
WORD_EMB_DIM = 16
POS_EMB_DIM = 8
WORD_ENC_DIM = 8         # char-LSTM word encoding dim
CHAR_EMB_DIM = 8
WIN_SIZE = 3
WORD_VOCAB = 50
POS_VOCAB = 10
CHAR_VOCAB = 20
MAX_CHAR_LEN = 6

OUT_PAD_LANES = 128      # lane-dense output slab width


# ----------------------------- Pallas kernel --------------------------------
def _score_kernel(hp_ref, w_ref, bias_ref, mask_ref, raw_ref, sm_ref, *, B, T, H):
    """Fused boundary scoring; raw + softmax emitted from one launch.

    hp_ref:   (B*T, 2H)      [h_prev | h]
    w_ref:    (2H, 4H)       [[Wc0_l|Wc0_r|  0  |  0  ],
                              [Wc1_l|Wc1_r| Wb_l| Wb_r]]
    bias_ref: (1, 4H)        [b_l | b_r | lw_l | lw_r]
    mask_ref: (2, B*T, B*T)  block-diag window masks (+ lin bias), -9999999 off-diag
    raw_ref:  (B*T, PAD)     lanes [0:BT)=left scores, [BT:2BT)=right, rest garbage
    sm_ref:   (B*T, PAD)     same layout, row-softmaxed
    """
    BT = B * T
    # One MXU op + one VPU broadcast-add feeds everything downstream.
    z = jnp.dot(hp_ref[...], w_ref[...], preferred_element_type=jnp.float32)  # (BT, 4H)
    z = z + bias_ref[...]
    feat = jnp.maximum(z[:, :2 * H], 0.0)   # [ReLU(conv_l) | ReLU(conv_r)]
    hw = z[:, 2 * H:]                       # [h@Wb_l + lw_l | h@Wb_r + lw_r]

    dn = (((1,), (1,)), ((), ()))           # contract last dims: A @ B^T
    # All B batches in one matmul per side; the -9999999 off-diagonal blocks of
    # the mask kill cross-batch terms (raw rows are sliced in the wrapper, and
    # exp(-1e7) underflows to exactly 0 in f32 for the softmax path).
    left = lax.dot_general(hw[:, :H], feat[:, :H], dn,
                           preferred_element_type=jnp.float32) + mask_ref[0]
    right = lax.dot_general(hw[:, H:], feat[:, H:], dn,
                            preferred_element_type=jnp.float32) + mask_ref[1]

    def softmax_rows(x):
        m = jnp.max(x, axis=-1, keepdims=True)
        e = jnp.exp(x - m)
        return e / jnp.sum(e, axis=-1, keepdims=True)   # exact normalization

    raw_ref[:, :BT] = left
    raw_ref[:, BT:2 * BT] = right
    sm_ref[:, :BT] = softmax_rows(left)
    sm_ref[:, BT:2 * BT] = softmax_rows(right)


def boundary_scores(hidden, p):
    """hidden: (B, T, H) f32 -> (left, right, left_sm, right_sm), each (B, T, T)."""
    B, T, H = hidden.shape
    BT = B * T
    # causal shift for the kernel-size-2 time conv (done in the wrapper):
    # TODO(synk): TimeConvLayer padding convention assumed causal (pad left).
    h_prev = jnp.pad(hidden, ((0, 0), (1, 0), (0, 0)))[:, :T, :]
    hp = jnp.concatenate([h_prev, hidden], axis=-1).astype(jnp.float32)
    hp = hp.reshape(BT, 2 * H)

    pad = max(OUT_PAD_LANES, 2 * BT)
    flops = 2 * BT * (2 * H) * (4 * H) + 2 * (2 * BT * H * BT)
    bytes_acc = 4 * (hp.size + p["w_big"].size + p["bias_row"].size
                     + p["mask_big"].size + 2 * BT * pad)
    vmem = pl.BlockSpec(memory_space=pltpu.MemorySpace.VMEM)

    kernel = functools.partial(_score_kernel, B=B, T=T, H=H)
    raw, sm = pl.pallas_call(
        kernel,
        out_shape=(jax.ShapeDtypeStruct((BT, pad), jnp.float32),
                   jax.ShapeDtypeStruct((BT, pad), jnp.float32)),
        in_specs=[vmem, vmem, vmem, vmem],
        out_specs=(vmem, vmem),
        cost_estimate=pl.CostEstimate(flops=flops,
                                      transcendentals=2 * BT * BT,
                                      bytes_accessed=bytes_acc),
    )(hp, p["w_big"], p["bias_row"], p["mask_big"])

    def split(full):
        lf, rf = full[:, :BT], full[:, BT:2 * BT]
        l = jnp.stack([lf[b * T:(b + 1) * T, b * T:(b + 1) * T] for b in range(B)])
        r = jnp.stack([rf[b * T:(b + 1) * T, b * T:(b + 1) * T] for b in range(B)])
        return l, r

    left, right = split(raw)
    left_sm, right_sm = split(sm)
    return left, right, left_sm, right_sm


def _pack_score_params(p, B, T, H):
    """Fused weight slab, packed bias row, and block-diagonal bias-folded masks."""
    f32 = jnp.float32
    zero_h = jnp.zeros((H, H), f32)
    row_prev = jnp.concatenate([p["conv_w_l"][0], p["conv_w_r"][0], zero_h, zero_h], axis=1)
    row_cur = jnp.concatenate([p["conv_w_l"][1], p["conv_w_r"][1],
                               p["bil_w_l"], p["bil_w_r"]], axis=1)
    w_big = jnp.concatenate([row_prev, row_cur], axis=0).astype(f32)          # (2H, 4H)

    bias_row = jnp.concatenate([p["conv_b_l"].reshape(1, H),
                                p["conv_b_r"].reshape(1, H),
                                p["lin_w_l"].reshape(1, H),
                                p["lin_w_r"].reshape(1, H)], axis=1).astype(f32)  # (1, 4H)

    eye = jnp.eye(B, dtype=f32)
    neg = jnp.full((T, T), -9999999.0, f32)

    def big(win_mask, lin_b):
        return (jnp.kron(eye, win_mask + lin_b.reshape(())) +
                jnp.kron(1.0 - eye, neg))

    mask_big = jnp.stack([big(p["left_mask"], p["lin_b_l"]),
                          big(p["right_mask"], p["lin_b_r"])]).astype(f32)    # (2, BT, BT)
    return w_big, bias_row, mask_big


# -------------------- pure-JAX reference (correctness check) ----------------
def _scores_ref(hidden, p, do_softmax):
    B, T, H = hidden.shape
    h_prev = jnp.pad(hidden, ((0, 0), (1, 0), (0, 0)))[:, :T, :]

    def side(cw, cb, bw, lw, lb, mask):
        feat = jax.nn.relu(h_prev @ cw[0] + hidden @ cw[1] + cb.reshape(1, 1, H))
        bil = jnp.einsum('bik,kl,bjl->bij', hidden, bw, feat)
        lin = feat @ lw.reshape(H, 1) + lb.reshape(())             # linear over j index
        score = bil + jnp.swapaxes(jnp.broadcast_to(lin, (B, T, T)), 1, 2) + mask
        return jax.nn.softmax(score, axis=-1) if do_softmax else score

    left = side(p["conv_w_l"], p["conv_b_l"], p["bil_w_l"],
                p["lin_w_l"], p["lin_b_l"], p["left_mask"])
    right = side(p["conv_w_r"], p["conv_b_r"], p["bil_w_r"],
                 p["lin_w_r"], p["lin_b_r"], p["right_mask"])
    return left, right


# ----------------------- plain-JAX glue (embeddings, LSTMs) -----------------
def _run_lstm(x, length, Wx, Wh, b, reverse=False):
    """x: (T, Din); masked (packed-sequence style) LSTM. Returns (outs, h_final)."""
    T = x.shape[0]
    Hd = Wh.shape[0]
    valid = (jnp.arange(T) < length)[:, None].astype(jnp.float32) > 0.0

    def step(carry, inp):
        h, c = carry
        xt, v = inp
        z = xt @ Wx + h @ Wh + b
        i, f, g, o = jnp.split(z, 4, axis=-1)
        i = jax.nn.sigmoid(i)
        f = jax.nn.sigmoid(f)
        o = jax.nn.sigmoid(o)
        g = jnp.tanh(g)
        c_new = f * c + i * g
        h_new = o * jnp.tanh(c_new)
        h = jnp.where(v, h_new, h)
        c = jnp.where(v, c_new, c)
        out = jnp.where(v, h_new, jnp.zeros_like(h_new))
        return (h, c), out

    init = (jnp.zeros((Hd,), jnp.float32), jnp.zeros((Hd,), jnp.float32))
    (h_fin, _), outs = lax.scan(step, init, (x, valid), reverse=reverse)
    return outs, h_fin


def _char_encode(chars, char_len, char_emb, Wx, Wh, b):
    # chars: (B, T, Lc) int32 ; returns (B, T, WORD_ENC_DIM)
    def per_word(c, l):
        x = char_emb[c]                     # (Lc, Dc)
        _, h_fin = _run_lstm(x, l, Wx, Wh, b)
        return h_fin
    return jax.vmap(jax.vmap(per_word))(chars, char_len)


def _bilstm(x, seq_len, pf, pb):
    # x: (B, T, Din) -> (B, T, HIDDEN_DIM) (fwd ++ bwd halves)
    def per_seq(xs, l):
        fwd, _ = _run_lstm(xs, l, *pf, reverse=False)
        bwd, _ = _run_lstm(xs, l, *pb, reverse=True)
        return jnp.concatenate([fwd, bwd], axis=-1)
    return jax.vmap(per_seq)(x, seq_len)


def boundary_model_forward_all(params, words, poss, seq_len, chars, char_len):
    """Runs the full forward ONCE and returns raw + softmaxed scores (+ hidden)."""
    embed_words = params["word_emb"][words]             # (B, T, Dw)
    embed_poss = params["pos_emb"][poss]                # (B, T, Dp)
    embed_chars = _char_encode(chars, char_len, params["char_emb"],
                               params["char_Wx"], params["char_Wh"],
                               params["char_b"])        # (B, T, We)
    concat = jnp.concatenate([embed_words, embed_poss, embed_chars], axis=-1)
    hidden = _bilstm(concat, seq_len,
                     (params["f_Wx"], params["f_Wh"], params["f_b"]),
                     (params["b_Wx"], params["b_Wh"], params["b_b"]))
    # dropout -> identity (eval mode)
    # TODO(synk): seq_len is not re-applied to the score matrices (matches the
    # PyTorch forward, which only applies the window masks).
    left, right, left_sm, right_sm = boundary_scores(hidden, params)
    return left, right, left_sm, right_sm, hidden


def boundary_model_forward(params, words, poss, seq_len, chars, char_len,
                           do_softmax=False):
    left, right, left_sm, right_sm, _ = boundary_model_forward_all(
        params, words, poss, seq_len, chars, char_len)
    return (left_sm, right_sm) if do_softmax else (left, right)


# ----------------------------- parameter init -------------------------------
def init_params(key):
    ks = jax.random.split(key, 20)

    def rnd(k, shape, scale=0.1):
        return scale * jax.random.normal(k, shape, dtype=jnp.float32)

    Din = WORD_EMB_DIM + POS_EMB_DIM + WORD_ENC_DIM
    Hd = HIDDEN_DIM // 2

    p = {
        "word_emb": rnd(ks[0], (WORD_VOCAB, WORD_EMB_DIM)),
        "pos_emb": rnd(ks[1], (POS_VOCAB, POS_EMB_DIM)),
        "char_emb": rnd(ks[2], (CHAR_VOCAB, CHAR_EMB_DIM)),
        "char_Wx": rnd(ks[3], (CHAR_EMB_DIM, 4 * WORD_ENC_DIM)),
        "char_Wh": rnd(ks[4], (WORD_ENC_DIM, 4 * WORD_ENC_DIM)),
        "char_b": jnp.zeros((4 * WORD_ENC_DIM,), jnp.float32),
        "f_Wx": rnd(ks[5], (Din, 4 * Hd)),
        "f_Wh": rnd(ks[6], (Hd, 4 * Hd)),
        "f_b": jnp.zeros((4 * Hd,), jnp.float32),
        "b_Wx": rnd(ks[7], (Din, 4 * Hd)),
        "b_Wh": rnd(ks[8], (Hd, 4 * Hd)),
        "b_b": jnp.zeros((4 * Hd,), jnp.float32),
        "conv_w_l": rnd(ks[9], (2, HIDDEN_DIM, HIDDEN_DIM)),
        "conv_b_l": rnd(ks[10], (1, HIDDEN_DIM)),
        "conv_w_r": rnd(ks[11], (2, HIDDEN_DIM, HIDDEN_DIM)),
        "conv_b_r": rnd(ks[12], (1, HIDDEN_DIM)),
        "bil_w_l": rnd(ks[13], (HIDDEN_DIM, HIDDEN_DIM)),
        "bil_w_r": rnd(ks[14], (HIDDEN_DIM, HIDDEN_DIM)),
        "lin_w_l": rnd(ks[15], (1, HIDDEN_DIM)),
        "lin_b_l": rnd(ks[17], (1, 1)),
        "lin_w_r": rnd(ks[16], (1, HIDDEN_DIM)),
        "lin_b_r": rnd(ks[18], (1, 1)),
    }

    # window boundary masks, identical to the torch loop in __init__
    i = jnp.arange(MAX_SEQ_LEN)[:, None]
    j = jnp.arange(MAX_SEQ_LEN)[None, :]
    left_allowed = (j >= i - WIN_SIZE) & (j <= i)
    right_allowed = (j >= i) & (j <= i + WIN_SIZE)
    p["left_mask"] = (1.0 - left_allowed.astype(jnp.float32)) * -9999999.0
    p["right_mask"] = (1.0 - right_allowed.astype(jnp.float32)) * -9999999.0

    # fused, lane-dense parameter slabs for the Pallas kernel (done once, f32).
    p["w_big"], p["bias_row"], p["mask_big"] = _pack_score_params(
        p, BATCH, MAX_SEQ_LEN, HIDDEN_DIM)
    return p


# ---------------------------------- main -------------------------------------
if __name__ == "__main__":
    key = jax.random.PRNGKey(0)
    pk, dk = jax.random.split(key)
    params = init_params(pk)

    k1, k2, k3, k4 = jax.random.split(dk, 4)
    words = jax.random.randint(k1, (BATCH, MAX_SEQ_LEN), 0, WORD_VOCAB)
    poss = jax.random.randint(k2, (BATCH, MAX_SEQ_LEN), 0, POS_VOCAB)
    chars = jax.random.randint(k3, (BATCH, MAX_SEQ_LEN, MAX_CHAR_LEN), 0, CHAR_VOCAB)
    char_len = jax.random.randint(k4, (BATCH, MAX_SEQ_LEN), 1, MAX_CHAR_LEN + 1)
    seq_len = jnp.array([MAX_SEQ_LEN, MAX_SEQ_LEN - 2], dtype=jnp.int32)

    # Single forward pass: raw + softmaxed scores come from ONE pallas_call,
    # and the char-LSTM / BiLSTM stack runs only once.
    left, right, left_sm, right_sm, hidden = boundary_model_forward_all(
        params, words, poss, seq_len, chars, char_len)
    jax.block_until_ready((left, right, left_sm, right_sm))

    assert left.shape == (BATCH, MAX_SEQ_LEN, MAX_SEQ_LEN)
    assert right.shape == (BATCH, MAX_SEQ_LEN, MAX_SEQ_LEN)
    assert left_sm.shape == (BATCH, MAX_SEQ_LEN, MAX_SEQ_LEN)
    assert right_sm.shape == (BATCH, MAX_SEQ_LEN, MAX_SEQ_LEN)

    # softmax rows must sum to ~1 (exact normalization in-kernel)
    assert bool(jnp.all(jnp.abs(jnp.sum(left_sm, axis=-1) - 1.0) < 1e-3))
    assert bool(jnp.all(jnp.abs(jnp.sum(right_sm, axis=-1) - 1.0) < 1e-3))

    # pure-JAX reference check of the fused scoring kernel
    ref_l, ref_r = _scores_ref(hidden, params, do_softmax=False)
    ref_lsm, ref_rsm = _scores_ref(hidden, params, do_softmax=True)
    allowed_l = params["left_mask"] == 0.0
    allowed_r = params["right_mask"] == 0.0
    assert bool(jnp.all(jnp.where(allowed_l, jnp.abs(left - ref_l), 0.0) < 1e-2))
    assert bool(jnp.all(jnp.where(allowed_r, jnp.abs(right - ref_r), 0.0) < 1e-2))
    assert bool(jnp.all(jnp.abs(left_sm - ref_lsm) < 1e-3))
    assert bool(jnp.all(jnp.abs(right_sm - ref_rsm) < 1e-3))

    print("KERNEL_OK")
</pallas_src>

<mosaic_0001>
module attributes {stable_mosaic.version = 11 : i64} {
  func.func @_score_kernel(%arg0: memref<16x64xf32, #tpu.memory_space<vmem>>, %arg1: memref<64x128xf32, #tpu.memory_space<vmem>>, %arg2: memref<1x128xf32, #tpu.memory_space<vmem>>, %arg3: memref<2x16x16xf32, #tpu.memory_space<vmem>>, %arg4: memref<16x128xf32, #tpu.memory_space<vmem>>, %arg5: memref<16x128xf32, #tpu.memory_space<vmem>>) attributes {dimension_semantics = [], scalar_prefetch = 0 : i64, scratch_operands = 0 : i64, tpu.core_type = #tpu.core_type<tc>} {
    %c0 = arith.constant 0 : index
    %c0_0 = arith.constant 0 : index
    %0 = vector.load %arg0[%c0, %c0_0] : memref<16x64xf32, #tpu.memory_space<vmem>>, vector<16x64xf32>
    %c0_1 = arith.constant 0 : index
    %c0_2 = arith.constant 0 : index
    %1 = vector.load %arg1[%c0_1, %c0_2] : memref<64x128xf32, #tpu.memory_space<vmem>>, vector<64x128xf32>
    %cst = arith.constant dense<0.000000e+00> : vector<16x128xf32>
    %2 = tpu.matmul %0, %1, %cst {dimension_numbers = #tpu.dot_dimension_numbers<[1], [0], [0], [1], [0, 0, 1, 1], [], []>} : vector<16x64xf32>, vector<64x128xf32>, vector<16x128xf32> -> vector<16x128xf32>
    %c0_3 = arith.constant 0 : index
    %c0_4 = arith.constant 0 : index
    %3 = vector.load %arg2[%c0_3, %c0_4] : memref<1x128xf32, #tpu.memory_space<vmem>>, vector<1x128xf32>
    %4 = vector.broadcast %3 : vector<1x128xf32> to vector<16x128xf32>
    %5 = arith.addf %2, %4 : vector<16x128xf32>
    %6 = vector.extract_strided_slice %5 {offsets = [0, 0], sizes = [16, 64], strides = [1, 1]} : vector<16x128xf32> to vector<16x64xf32>
    %cst_5 = arith.constant 0.000000e+00 : f32
    %7 = vector.broadcast %cst_5 : f32 to vector<16x64xf32>
    %8 = arith.maximumf %6, %7 : vector<16x64xf32>
    %9 = vector.extract_strided_slice %5 {offsets = [0, 64], sizes = [16, 64], strides = [1, 1]} : vector<16x128xf32> to vector<16x64xf32>
    %10 = vector.extract_strided_slice %9 {offsets = [0, 0], sizes = [16, 32], strides = [1, 1]} : vector<16x64xf32> to vector<16x32xf32>
    %11 = vector.extract_strided_slice %8 {offsets = [0, 0], sizes = [16, 32], strides = [1, 1]} : vector<16x64xf32> to vector<16x32xf32>
    %cst_6 = arith.constant dense<0.000000e+00> : vector<16x16xf32>
    %12 = tpu.matmul %10, %11, %cst_6 {dimension_numbers = #tpu.dot_dimension_numbers<[1], [1], [0], [0], [0, 0, 1, 0], [], []>} : vector<16x32xf32>, vector<16x32xf32>, vector<16x16xf32> -> vector<16x16xf32>
    %c0_7 = arith.constant 0 : index
    %c0_8 = arith.constant 0 : index
    %c0_9 = arith.constant 0 : index
    %13 = vector.load %arg3[%c0_7, %c0_8, %c0_9] : memref<2x16x16xf32, #tpu.memory_space<vmem>>, vector<1x16x16xf32>
    %14 = vector.shape_cast %13 : vector<1x16x16xf32> to vector<16x16xf32>
    %15 = arith.addf %12, %14 : vector<16x16xf32>
    %16 = vector.extract_strided_slice %9 {offsets = [0, 32], sizes = [16, 32], strides = [1, 1]} : vector<16x64xf32> to vector<16x32xf32>
    %17 = vector.extract_strided_slice %8 {offsets = [0, 32], sizes = [16, 32], strides = [1, 1]} : vector<16x64xf32> to vector<16x32xf32>
    %cst_10 = arith.constant dense<0.000000e+00> : vector<16x16xf32>
    %18 = tpu.matmul %16, %17, %cst_10 {dimension_numbers = #tpu.dot_dimension_numbers<[1], [1], [0], [0], [0, 0, 1, 0], [], []>} : vector<16x32xf32>, vector<16x32xf32>, vector<16x16xf32> -> vector<16x16xf32>
    %c1 = arith.constant 1 : index
    %c0_11 = arith.constant 0 : index
    %c0_12 = arith.constant 0 : index
    %19 = vector.load %arg3[%c1, %c0_11, %c0_12] : memref<2x16x16xf32, #tpu.memory_space<vmem>>, vector<1x16x16xf32>
    %20 = vector.shape_cast %19 : vector<1x16x16xf32> to vector<16x16xf32>
    %21 = arith.addf %18, %20 : vector<16x16xf32>
    %c0_13 = arith.constant 0 : index
    %c0_14 = arith.constant 0 : index
    %22 = vector.load %arg4[%c0_13, %c0_14] : memref<16x128xf32, #tpu.memory_space<vmem>>, vector<16x16xf32>
    tpu.vector_store %arg4[%c0_13, %c0_14], %15 {strides = array<i32>} : memref<16x128xf32, #tpu.memory_space<vmem>>, vector<16x16xf32>,
    %c0_15 = arith.constant 0 : index
    %c16 = arith.constant 16 : index
    %23 = vector.load %arg4[%c0_15, %c16] : memref<16x128xf32, #tpu.memory_space<vmem>>, vector<16x16xf32>
    tpu.vector_store %arg4[%c0_15, %c16], %21 {strides = array<i32>} : memref<16x128xf32, #tpu.memory_space<vmem>>, vector<16x16xf32>,
    %cst_16 = arith.constant dense<0xFF800000> : vector<16xf32>
    %24 = vector.multi_reduction <maximumf>, %15, %cst_16 [1] : vector<16x16xf32> to vector<16xf32>
    %25 = vector.shape_cast %24 : vector<16xf32> to vector<16x1xf32>
    %26 = vector.broadcast %25 : vector<16x1xf32> to vector<16x16xf32>
    %27 = arith.subf %15, %26 : vector<16x16xf32>
    %28 = math.exp %27 : vector<16x16xf32>
    %cst_17 = arith.constant dense<0.000000e+00> : vector<16xf32>
    %29 = vector.multi_reduction <add>, %28, %cst_17 [1] : vector<16x16xf32> to vector<16xf32>
    %30 = vector.shape_cast %29 : vector<16xf32> to vector<16x1xf32>
    %31 = vector.broadcast %30 : vector<16x1xf32> to vector<16x16xf32>
    %32 = arith.divf %28, %31 : vector<16x16xf32>
    %c0_18 = arith.constant 0 : index
    %c0_19 = arith.constant 0 : index
    %33 = vector.load %arg5[%c0_18, %c0_19] : memref<16x128xf32, #tpu.memory_space<vmem>>, vector<16x16xf32>
    tpu.vector_store %arg5[%c0_18, %c0_19], %32 {strides = array<i32>} : memref<16x128xf32, #tpu.memory_space<vmem>>, vector<16x16xf32>,
    %cst_20 = arith.constant dense<0xFF800000> : vector<16xf32>
    %34 = vector.multi_reduction <maximumf>, %21, %cst_20 [1] : vector<16x16xf32> to vector<16xf32>
    %35 = vector.shape_cast %34 : vector<16xf32> to vector<16x1xf32>
    %36 = vector.broadcast %35 : vector<16x1xf32> to vector<16x16xf32>
    %37 = arith.subf %21, %36 : vector<16x16xf32>
    %38 = math.exp %37 : vector<16x16xf32>
    %cst_21 = arith.constant dense<0.000000e+00> : vector<16xf32>
    %39 = vector.multi_reduction <add>, %38, %cst_21 [1] : vector<16x16xf32> to vector<16xf32>
    %40 = vector.shape_cast %39 : vector<16xf32> to vector<16x1xf32>
    %41 = vector.broadcast %40 : vector<16x1xf32> to vector<16x16xf32>
    %42 = arith.divf %38, %41 : vector<16x16xf32>
    %c0_22 = arith.constant 0 : index
    %c16_23 = arith.constant 16 : index
    %43 = vector.load %arg5[%c0_22, %c16_23] : memref<16x128xf32, #tpu.memory_space<vmem>>, vector<16x16xf32>
    tpu.vector_store %arg5[%c0_22, %c16_23], %42 {strides = array<i32>} : memref<16x128xf32, #tpu.memory_space<vmem>>, vector<16x16xf32>,
    return
  }
}

</mosaic_0001>

<llo_original>
// kernel: tpu_custom_call.1
$region0: #{tpu_custom_call.1}
  #allocation0 [shape = 'u32[]', space=smem, size = 0x4, offset = 0x4, fixed_abs, tag = 'smem constant byte address 0x4 - core index']
  #allocation1 [shape = 'u32[72,128]{1,0:T(1,128)}', space=vmem, size = 0x9000, scoped, tag = 'internal scratch']
  %s0 = inlined_call_operand.hbm [shape: f32[16,64], index: 0, kind: input, shape index: {}]
  %s1 = inlined_call_operand.hbm [shape: f32[64,128], index: 1, kind: input, shape index: {}]
  %s2 = inlined_call_operand.vmem [shape: f32[1,128], index: 2, kind: input, shape index: {}]
  %s3 = inlined_call_operand.hbm [shape: f32[2,16,16], index: 3, kind: input, shape index: {}]
  %s4 = inlined_call_operand.hbm [shape: f32[16,128], index: 4, kind: output, shape index: {0}]
  %s5 = inlined_call_operand.hbm [shape: f32[16,128], index: 5, kind: output, shape index: {1}]
  %6 = xla_tuple %s4, %s5
  %s7 = sld [smem:[#allocation0]]
  $region46: #{tpu_custom_call.1} parent=0
    _
  %s9 = ssub.s32 1, %s7
  %s10 = scalar_select 0, %s9, %s7
  $region1: #{tpu_custom_call.1} parent=0
    #allocation2 [shape = 'u8[8192]{0}', space=vmem, size = 0x2000, scoped, tag = 'input window, operand 0, single buffered']
    #allocation3 [shape = 's32[1]{0}', space=sflag, size = 0x4, scoped, tag = 'scoped memory for tpu_custom_call.1']
    #allocation4 [shape = 's32[1]{0}', space=sflag, size = 0x4, scoped, tag = 'scoped memory for tpu_custom_call.1']
    #allocation5 [shape = 'u8[32768]{0}', space=vmem, size = 0x8000, scoped, tag = 'input window, operand 1, single buffered']
    #allocation6 [shape = 's32[1]{0}', space=sflag, size = 0x4, scoped, tag = 'scoped memory for tpu_custom_call.1']
    #allocation7 [shape = 'u8[16384]{0}', space=vmem, size = 0x4000, scoped, tag = 'input window, operand 3, single buffered']
    #allocation8 [shape = 'u8[8192]{0}', space=vmem, size = 0x2000, scoped, tag = 'output window, operand 0, single buffered']
    #allocation9 [shape = 'u8[8192]{0}', space=vmem, size = 0x2000, scoped, tag = 'output window, operand 1, single buffered']
    #allocation10 [shape = 's32[1]{0}', space=sflag, size = 0x4, scoped, tag = 'scoped memory for tpu_custom_call.1']
    %11 = vsyncpa [#allocation3], 0
    %12 = vsyncpa [#allocation6], 0
    %13 = vsyncpa [#allocation4], 0
    %14 = vsyncpa [#allocation10], 0
    // Predicated region
    $region2: #{tpu_custom_call.1} parent=1 // pred_check
      _
    $region3: #{tpu_custom_call.1} parent=1 // pred_check_branch
      %16 = sbr.rel (0) target = $region5
    $region4: #{tpu_custom_call.1} parent=1 // pred_region
      %18 = vsyncadd [#allocation3], 0
      %s19 = sshll.u32 %s0, 4
      %s20 = int_to_ptr.hbm [resolvable:$true] %s19
      %s21 = sshll.u32 [#allocation2], 4
      %s22 = int_to_ptr.vmem [resolvable:$true] %s21
      %27 = dma.hbm_to_vmem [thread:$0]  %s20, 256, %s22, [#allocation3], 128, 128, 8
    $region5: #{tpu_custom_call.1} parent=1 // pred_fallthru
      _
    // Predicated region
    $region6: #{tpu_custom_call.1} parent=1 // pred_check
      _
    $region7: #{tpu_custom_call.1} parent=1 // pred_check_branch
      %29 = sbr.rel (0) target = $region9
    $region8: #{tpu_custom_call.1} parent=1 // pred_region
      %31 = vsyncadd [#allocation6], 0
      %s32 = sshll.u32 %s1, 4
      %s33 = int_to_ptr.hbm [resolvable:$true] %s32
      %s34 = sshll.u32 [#allocation5], 4
      %s35 = int_to_ptr.vmem [resolvable:$true] %s34
      %40 = dma.hbm_to_vmem [thread:$0]  %s33, 1024, %s35, [#allocation6], 128, 128, 8
    $region9: #{tpu_custom_call.1} parent=1 // pred_fallthru
      _
    // Predicated region
    $region10: #{tpu_custom_call.1} parent=1 // pred_check
      _
    $region11: #{tpu_custom_call.1} parent=1 // pred_check_branch
      %42 = sbr.rel (0) target = $region13
    $region12: #{tpu_custom_call.1} parent=1 // pred_region
      _
    $region13: #{tpu_custom_call.1} parent=1 // pred_fallthru
      _
    // Predicated region
    $region14: #{tpu_custom_call.1} parent=1 // pred_check
      _
    $region15: #{tpu_custom_call.1} parent=1 // pred_check_branch
      %44 = sbr.rel (0) target = $region17
    $region16: #{tpu_custom_call.1} parent=1 // pred_region
      %46 = vsyncadd [#allocation6], 0
      %s47 = sshll.u32 %s3, 4
      %s48 = int_to_ptr.hbm [resolvable:$true] %s47
      %s49 = sshll.u32 [#allocation7], 4
      %s50 = int_to_ptr.vmem [resolvable:$true] %s49
      %55 = dma.hbm_to_vmem [thread:$0]  %s48, 512, %s50, [#allocation6], 128, 128, 8
    $region17: #{tpu_custom_call.1} parent=1 // pred_fallthru
      _
    // Predicated region
    $region18: #{tpu_custom_call.1} parent=1 // pred_check
      _
    $region19: #{tpu_custom_call.1} parent=1 // pred_check_branch
      %57 = sbr.rel (0) target = $region21
    $region20: #{tpu_custom_call.1} parent=1 // pred_region
      %59 = dma.done [#allocation3], 256
    $region21: #{tpu_custom_call.1} parent=1 // pred_fallthru
      _
    // Predicated region
    $region22: #{tpu_custom_call.1} parent=1 // pred_check
      _
    $region23: #{tpu_custom_call.1} parent=1 // pred_check_branch
      %61 = sbr.rel (0) target = $region25
    $region24: #{tpu_custom_call.1} parent=1 // pred_region
      %63 = dma.done [#allocation6], 1024
    $region25: #{tpu_custom_call.1} parent=1 // pred_fallthru
      _
    // Predicated region
    $region26: #{tpu_custom_call.1} parent=1 // pred_check
      _
    $region27: #{tpu_custom_call.1} parent=1 // pred_check_branch
      %65 = sbr.rel (0) target = $region29
    $region28: #{tpu_custom_call.1} parent=1 // pred_region
      %67 = dma.done [#allocation6], 512
    $region29: #{tpu_custom_call.1} parent=1 // pred_fallthru
      _
    %v68 = vld [vmem:[#allocation2] sm:$0xff]
    %v69 = vld [vmem:[#allocation2 + $0x8] sm:$0xff]
    %v70 = vld [vmem:[#allocation5] sm:$0xff]
    %v71 = vld [vmem:[#allocation5 + $0x8] sm:$0xff]
    %v72 = vld [vmem:[#allocation5 + $0x10] sm:$0xff]
    %v73 = vld [vmem:[#allocation5 + $0x18] sm:$0xff]
    %v74 = vld [vmem:[#allocation5 + $0x20] sm:$0xff]
    %v75 = vld [vmem:[#allocation5 + $0x28] sm:$0xff]
    %v76 = vld [vmem:[#allocation5 + $0x30] sm:$0xff]
    %v77 = vld [vmem:[#allocation5 + $0x38] sm:$0xff]
    %v78 = vld [vmem:[%s2] sm:$0x1]
    %v80 = vperm.slane %v78, 0
    %vm82 = vcmask 523264
    %v84 = vsel %vm82, %v68, 0
    %v87 = vsel %vm82, %v69, 0
    %89 = vmatpush.msra.mxu0 0.0
    %90 = vmatpush.msra.mxu0 0.0
    %91 = vmatpush.msra.mxu0 0.0
    %92 = vmatpush.msra.mxu0 0.0
    %93 = vmatpush.msra.mxu0 0.0
    %94 = vmatpush.msra.mxu0 0.0
    %95 = vmatpush.msra.mxu0 0.0
    %96 = vmatpush.msra.mxu0 0.0
    %97 = vmatpush.msra.mxu0 %v77
    %98 = vmatpush.msra.mxu0 %v76
    %99 = vmatpush.msra.mxu0 %v75
    %100 = vmatpush.msra.mxu0 %v74
    %101 = vmatpush.msra.mxu0 %v73
    %102 = vmatpush.msra.mxu0 %v72
    %103 = vmatpush.msra.mxu0 %v71
    %104 = vmatpush.msra.mxu0 %v70
    %105 = vmatmul.f32.gmra.mxu0 %v84
    %v106 = vpop.f32.mrf.mxu0
    %v107 = vadd.f32 %v80, %v106
    %108 = vmatmul.f32.gmra.mxu0 %v87
    %v109 = vpop.f32.mrf.mxu0
    %v110 = vadd.f32 %v80, %v109
    %111 = vdwg.mxu0
    %v112 = vmax.f32 %v107, 0.0
    %v113 = vmax.f32 %v110, 0.0
    %v114 = vld [vmem:[#allocation7] sm:$0xff]
    %v115 = vld [vmem:[#allocation7 + $0x8] sm:$0xff]
    %118 = vrot.lane.b32.xlu0 %v107, 64
    %v119 = vpop.permute.xlu0 %118
    %120 = vrot.lane.b32.xlu0 %v110, 64
    %v121 = vpop.permute.xlu0 %120
    %vm122 = vcmask 261120
    %v123 = vsel %vm122, %v119, 0
    %v125 = vsel %vm122, %v121, 0
    %v128 = vsel %vm122, %v112, 0
    %v131 = vsel %vm122, %v113, 0
    %133 = vmatpush.xpose.msra.mxu0 0.0
    %134 = vmatpush.xpose.msra.mxu0 0.0
    %135 = vmatpush.xpose.msra.mxu0 0.0
    %136 = vmatpush.xpose.msra.mxu0 0.0
    %137 = vmatpush.xpose.msra.mxu0 0.0
    %138 = vmatpush.xpose.msra.mxu0 0.0
    %139 = vmatpush.xpose.msra.mxu0 0.0
    %140 = vmatpush.xpose.msra.mxu0 0.0
    %141 = vmatpush.xpose.msra.mxu0 0.0
    %142 = vmatpush.xpose.msra.mxu0 0.0
    %143 = vmatpush.xpose.msra.mxu0 0.0
    %144 = vmatpush.xpose.msra.mxu0 0.0
    %145 = vmatpush.xpose.msra.mxu0 0.0
    %146 = vmatpush.xpose.msra.mxu0 0.0
    %147 = vmatpush.xpose.msra.mxu0 %v131
    %148 = vmatpush.xpose.msra.mxu0 %v128
    %149 = vmatmul.f32.gmra.mxu0 %v123
    %v150 = vpop.f32.mrf.mxu0
    %v151 = vadd.f32 %v114, %v150
    %152 = vmatmul.f32.gmra.mxu0 %v125
    %v153 = vpop.f32.mrf.mxu0
    %v154 = vadd.f32 %v115, %v153
    %155 = vdwg.mxu0
    %s156 = scalar_lea.vmem [#allocation7], 16
    %v157 = vld [vmem:[%s156] sm:$0xff]
    %v158 = vld [vmem:[%s156 + $0x8] sm:$0xff]
    %159 = vrot.lane.b32.xlu0 %v107, 32
    %v160 = vpop.permute.xlu0 %159
    %161 = vrot.lane.b32.xlu0 %v110, 32
    %v162 = vpop.permute.xlu0 %161
    %163 = vrot.lane.b32.xlu0 %v112, 96
    %v164 = vpop.permute.xlu0 %163
    %165 = vrot.lane.b32.xlu0 %v113, 96
    %v166 = vpop.permute.xlu0 %165
    %v167 = vsel %vm122, %v160, 0
    %v169 = vsel %vm122, %v162, 0
    %v171 = vsel %vm122, %v164, 0
    %v173 = vsel %vm122, %v166, 0
    %175 = vmatpush.xpose.msra.mxu0 0.0
    %176 = vmatpush.xpose.msra.mxu0 0.0
    %177 = vmatpush.xpose.msra.mxu0 0.0
    %178 = vmatpush.xpose.msra.mxu0 0.0
    %179 = vmatpush.xpose.msra.mxu0 0.0
    %180 = vmatpush.xpose.msra.mxu0 0.0
    %181 = vmatpush.xpose.msra.mxu0 0.0
    %182 = vmatpush.xpose.msra.mxu0 0.0
    %183 = vmatpush.xpose.msra.mxu0 0.0
    %184 = vmatpush.xpose.msra.mxu0 0.0
    %185 = vmatpush.xpose.msra.mxu0 0.0
    %186 = vmatpush.xpose.msra.mxu0 0.0
    %187 = vmatpush.xpose.msra.mxu0 0.0
    %188 = vmatpush.xpose.msra.mxu0 0.0
    %189 = vmatpush.xpose.msra.mxu0 %v173
    %190 = vmatpush.xpose.msra.mxu0 %v171
    %191 = vmatmul.f32.gmra.mxu0 %v167
    %v192 = vpop.f32.mrf.mxu0
    %v193 = vadd.f32 %v157, %v192
    %194 = vmatmul.f32.gmra.mxu0 %v169
    %v195 = vpop.f32.mrf.mxu0
    %v196 = vadd.f32 %v158, %v195
    %197 = vdwg.mxu0
    %vm198 = vcmask 130048
    %199 = vst.msk [vmem:[#allocation8] sm:$0xff] %vm198, %v151
    %200 = vst.msk [vmem:[#allocation8 + $0x8] sm:$0xff] %vm198, %v154
    %203 = vrot.lane.b32.xlu0 %v193, 16
    %v204 = vpop.permute.xlu0 %203
    %205 = vrot.lane.b32.xlu0 %v196, 16
    %v206 = vpop.permute.xlu0 %205
    %vm209 = vcmask 261248
    %210 = vst.msk [vmem:[#allocation8] sm:$0xff] %vm209, %v204
    %211 = vst.msk [vmem:[#allocation8 + $0x8] sm:$0xff] %vm209, %v206
    %v212 = vsel %vm198, %v151, -inf
    %213 = vmax.xlane.f32.xlu0 %v212
    %v214 = vpop.xlane.xlu0 %213
    %v215 = vsel %vm198, %v154, -inf
    %216 = vmax.xlane.f32.xlu0 %v215
    %v217 = vpop.xlane.xlu0 %216
    %v218 = vsub.f32 %v151, %v214
    %v219 = vsub.f32 %v154, %v217
    %v220 = vmul.f32 %v218, 1.442695
    %v221 = vpow.pop %v220
    %v222 = vmul.f32 %v219, 1.442695
    %v223 = vpow.pop %v222
    %v224 = vsel %vm198, %v221, 0.0
    %225 = vadd.xlane.f32.xlu0 %v224
    %v226 = vpop.xlane.xlu0 %225
    %v227 = vsel %vm198, %v223, 0.0
    %228 = vadd.xlane.f32.xlu0 %v227
    %v229 = vpop.xlane.xlu0 %228
    %v230 = vrcp.pop %v226
    %v231 = vmul.f32 %v226, %v230
    %v232 = vsub.f32 1.0, %v231
    %v233 = vmul.f32 %v230, %v232
    %v234 = vadd.f32 %v230, %v233
    %vm235 = vweird.f32 %v226
    %vm236 = vweird.f32 %v230
    %vm237 = vmor %vm235, %vm236
    %v238 = vsel %vm237, %v230, %v234
    %v239 = vand.u32 2147483647, %v226
    %vm240 = vcmp.eq.f32.partialorder %v239, 8.507059e+37
    %v241 = vand.u32 %v226, 2147483648
    %v242 = vor.u32 1.1754944e-38, %v241
    %v243 = vsel %vm240, %v242, %v238
    %v244 = vmul.f32 %v221, %v243
    %v245 = vrcp.pop %v229
    %v246 = vmul.f32 %v229, %v245
    %v247 = vsub.f32 1.0, %v246
    %v248 = vmul.f32 %v245, %v247
    %v249 = vadd.f32 %v245, %v248
    %vm250 = vweird.f32 %v229
    %vm251 = vweird.f32 %v245
    %vm252 = vmor %vm250, %vm251
    %v253 = vsel %vm252, %v245, %v249
    %v254 = vand.u32 2147483647, %v229
    %vm255 = vcmp.eq.f32.partialorder %v254, 8.507059e+37
    %v256 = vand.u32 %v229, 2147483648
    %v257 = vor.u32 1.1754944e-38, %v256
    %v258 = vsel %vm255, %v257, %v253
    %v259 = vmul.f32 %v223, %v258
    %260 = vst.msk [vmem:[#allocation9] sm:$0xff] %vm198, %v244
    %261 = vst.msk [vmem:[#allocation9 + $0x8] sm:$0xff] %vm198, %v259
    %v262 = vsel %vm198, %v193, -inf
    %263 = vmax.xlane.f32.xlu0 %v262
    %v264 = vpop.xlane.xlu0 %263
    %v265 = vsel %vm198, %v196, -inf
    %266 = vmax.xlane.f32.xlu0 %v265
    %v267 = vpop.xlane.xlu0 %266
    %v268 = vsub.f32 %v193, %v264
    %v269 = vsub.f32 %v196, %v267
    %v270 = vmul.f32 %v268, 1.442695
    %v271 = vpow.pop %v270
    %v272 = vmul.f32 %v269, 1.442695
    %v273 = vpow.pop %v272
    %v274 = vsel %vm198, %v271, 0.0
    %275 = vadd.xlane.f32.xlu0 %v274
    %v276 = vpop.xlane.xlu0 %275
    %v277 = vsel %vm198, %v273, 0.0
    %278 = vadd.xlane.f32.xlu0 %v277
    %v279 = vpop.xlane.xlu0 %278
    %v280 = vrcp.pop %v276
    %v281 = vmul.f32 %v276, %v280
    %v282 = vsub.f32 1.0, %v281
    %v283 = vmul.f32 %v280, %v282
    %v284 = vadd.f32 %v280, %v283
    %vm285 = vweird.f32 %v276
    %vm286 = vweird.f32 %v280
    %vm287 = vmor %vm285, %vm286
    %v288 = vsel %vm287, %v280, %v284
    %v289 = vand.u32 2147483647, %v276
    %vm290 = vcmp.eq.f32.partialorder %v289, 8.507059e+37
    %v291 = vand.u32 %v276, 2147483648
    %v292 = vor.u32 1.1754944e-38, %v291
    %v293 = vsel %vm290, %v292, %v288
    %v294 = vmul.f32 %v271, %v293
    %v295 = vrcp.pop %v279
    %v296 = vmul.f32 %v279, %v295
    %v297 = vsub.f32 1.0, %v296
    %v298 = vmul.f32 %v295, %v297
    %v299 = vadd.f32 %v295, %v298
    %vm300 = vweird.f32 %v279
    %vm301 = vweird.f32 %v295
    %vm302 = vmor %vm300, %vm301
    %v303 = vsel %vm302, %v295, %v299
    %v304 = vand.u32 2147483647, %v279
    %vm305 = vcmp.eq.f32.partialorder %v304, 8.507059e+37
    %v306 = vand.u32 %v279, 2147483648
    %v307 = vor.u32 1.1754944e-38, %v306
    %v308 = vsel %vm305, %v307, %v303
    %v309 = vmul.f32 %v273, %v308
    %312 = vrot.lane.b32.xlu0 %v294, 16
    %v313 = vpop.permute.xlu0 %312
    %314 = vrot.lane.b32.xlu0 %v309, 16
    %v315 = vpop.permute.xlu0 %314
    %318 = vst.msk [vmem:[#allocation9] sm:$0xff] %vm209, %v313
    %319 = vst.msk [vmem:[#allocation9 + $0x8] sm:$0xff] %vm209, %v315
    // Predicated region
    $region30: #{tpu_custom_call.1} parent=1 // pred_check
      _
    $region31: #{tpu_custom_call.1} parent=1 // pred_check_branch
      %321 = sbr.rel (0) target = $region33
    $region32: #{tpu_custom_call.1} parent=1 // pred_region
      %323 = vsyncadd [#allocation4], 0
      %s324 = sshll.u32 [#allocation8], 4
      %s325 = int_to_ptr.vmem [resolvable:$true] %s324
      %s326 = sshll.u32 %s4, 4
      %s327 = int_to_ptr.hbm [resolvable:$true] %s326
      %332 = dma.vmem_to_hbm [thread:$0]  %s325, 256, %s327, [#allocation4], 128, 128, 8
    $region33: #{tpu_custom_call.1} parent=1 // pred_fallthru
      _
    // Predicated region
    $region34: #{tpu_custom_call.1} parent=1 // pred_check
      _
    $region35: #{tpu_custom_call.1} parent=1 // pred_check_branch
      %334 = sbr.rel (0) target = $region37
    $region36: #{tpu_custom_call.1} parent=1 // pred_region
      %336 = vsyncadd [#allocation10], 0
      %s337 = sshll.u32 [#allocation9], 4
      %s338 = int_to_ptr.vmem [resolvable:$true] %s337
      %s339 = sshll.u32 %s5, 4
      %s340 = int_to_ptr.hbm [resolvable:$true] %s339
      %345 = dma.vmem_to_hbm [thread:$0]  %s338, 256, %s340, [#allocation10], 128, 128, 8
    $region37: #{tpu_custom_call.1} parent=1 // pred_fallthru
      _
    // Predicated region
    $region38: #{tpu_custom_call.1} parent=1 // pred_check
      _
    $region39: #{tpu_custom_call.1} parent=1 // pred_check_branch
      %347 = sbr.rel (0) target = $region41
    $region40: #{tpu_custom_call.1} parent=1 // pred_region
      %349 = dma.done [#allocation4], 256
    $region41: #{tpu_custom_call.1} parent=1 // pred_fallthru
      _
    // Predicated region
    $region42: #{tpu_custom_call.1} parent=1 // pred_check
      _
    $region43: #{tpu_custom_call.1} parent=1 // pred_check_branch
      %351 = sbr.rel (0) target = $region45
    $region44: #{tpu_custom_call.1} parent=1 // pred_region
      %353 = dma.done [#allocation10], 256
    $region45: #{tpu_custom_call.1} parent=1 // pred_fallthru
      _
    %354 = vsyncpa [#allocation3], 1
    %355 = vsyncpa [#allocation6], 1
    %356 = vsyncpa [#allocation4], 1
    %357 = vsyncpa [#allocation10], 1

</llo_original>
